<compile_context>
chip_gen: v6e
topology: v6e:2x2x1
jax: 0.10.0
libtpu: 0.0.40
codegen_flags: <defaults>
</compile_context>

<pallas_src>
import math

import jax
import jax.numpy as jnp
from jax.experimental import pallas as pl
from jax.experimental.pallas import tpu as pltpu


def hgf_step_kernel(coef_ref, a_ref, c_ref, x_ref, noise_ref, prev_ref, mean_ref):
    # remaining scheduler scalars (everything else is folded into A_bd / c)
    coef1 = coef_ref[0]   # pred_original_sample coefficient
    coef2 = coef_ref[1]   # current_sample coefficient
    std = coef_ref[2]     # posterior std (fixed_small variance)

    x = x_ref[...]        # (RB, LT): RB sublane-packed rows = G batches x C channels
    a = a_ref[...]        # (RB, RB): block-diagonal folded affine  inv_sqrt_abar*I - cb*W
    rb = x.shape[0]

    # pred_x0 = clip(A_bd @ x + c, -1, 1): folded affine channel mix on the VPU (RB tiny).
    acc = c_ref[...] + a[:, 0:1] * x[0:1, :]
    for k in range(1, rb):
        acc = acc + a[:, k:k + 1] * x[k:k + 1, :]
    pred_x0 = jnp.clip(acc, -1.0, 1.0)

    # DDPM posterior step (variance_type='fixed_small', clip=True, langevin_correction == 0)
    mean = coef1 * pred_x0 + coef2 * x
    mean_ref[...] = mean
    prev_ref[...] = mean + std * noise_ref[...]


def _row_block(rows, channels):
    """Smallest sublane-packed (multiple-of-8) row block that is a whole number of batches."""
    rb = (channels * 8) // math.gcd(channels, 8)   # lcm(C, 8)
    return rb if rows % rb == 0 else rows          # full-dim fallback is always legal


def _lane_tile(hw, rb, budget_bytes):
    """Largest lane tile (multiple of 128 dividing hw) whose pipelined footprint fits VMEM."""
    per_lane = 2 * 4 * rb * 4            # double-buffer x 4 f32 streams (x, noise, prev, mean)
    max_lane = max(budget_bytes // per_lane, 128)
    if hw <= max_lane or hw % 128 != 0:
        return hw                        # single full-dim block
    lt = min((max_lane // 128) * 128, hw)
    while lt > 128 and hw % lt != 0:
        lt -= 128
    return lt if hw % lt == 0 else hw


def hgf_node_forward(x, noise, w, b_plus_temb, inv_sqrt_abar, cb, coef1, coef2, std):
    """x, noise: (B, C, H, W) f32.  Returns (prev_sample, posterior_mean), both (B, C, H, W)."""
    B, C, H, W = x.shape
    R, HW = B * C, H * W

    # Transpose-free slab: (B*C, H*W) is a pure reshape of the contiguous (B, C, H, W) layout.
    x2 = x.reshape(R, HW)
    n2 = noise.reshape(R, HW)

    rb = _row_block(R, C)
    g = rb // C                                                     # batches per row block
    lane_tile = _lane_tile(HW, rb, budget_bytes=40 * 1024 * 1024)

    # Fold scheduler scalars + bias/time-embedding into one affine map (exact: clip is after it).
    a = inv_sqrt_abar * jnp.eye(C, dtype=jnp.float32) - cb * w      # (C, C)
    a_bd = jnp.kron(jnp.eye(g, dtype=jnp.float32), a)               # (rb, rb) block-diagonal
    c_blk = jnp.tile(-cb * b_plus_temb, (g, 1)).astype(jnp.float32) # (rb, 1)
    coefs = jnp.stack([coef1, coef2, std]).astype(jnp.float32)      # SMEM scalars

    grid = (R // rb, HW // lane_tile)
    prev, mean = pl.pallas_call(
        hgf_step_kernel,
        out_shape=(jax.ShapeDtypeStruct((R, HW), jnp.float32),
                   jax.ShapeDtypeStruct((R, HW), jnp.float32)),
        grid=grid,
        in_specs=[
            pl.BlockSpec(memory_space=pltpu.MemorySpace.SMEM),      # coef1/coef2/std
            pl.BlockSpec((rb, rb), lambda i, j: (0, 0)),            # folded affine A_bd
            pl.BlockSpec((rb, 1), lambda i, j: (0, 0)),             # folded bias c
            pl.BlockSpec((rb, lane_tile), lambda i, j: (i, j)),     # x slab
            pl.BlockSpec((rb, lane_tile), lambda i, j: (i, j)),     # noise slab
        ],
        out_specs=(
            pl.BlockSpec((rb, lane_tile), lambda i, j: (i, j)),     # prev_sample
            pl.BlockSpec((rb, lane_tile), lambda i, j: (i, j)),     # posterior_mean
        ),
        compiler_params=pltpu.CompilerParams(
            dimension_semantics=("parallel", "parallel"),
            vmem_limit_bytes=48 * 1024 * 1024),
    )(coefs, a_bd, c_blk, x2, n2)

    return prev.reshape(B, C, H, W), mean.reshape(B, C, H, W)


if __name__ == "__main__":
    key = jax.random.PRNGKey(0)
    kx, kn, kw, kb = jax.random.split(key, 4)

    B, C, H, W = 2, 4, 16, 16
    x = jax.random.normal(kx, (B, C, H, W), dtype=jnp.float32)
    noise = jax.random.normal(kn, (B, C, H, W), dtype=jnp.float32)

    # deterministic synthetic policy parameters (1x1 conv weight + bias)
    w = jax.random.normal(kw, (C, C), dtype=jnp.float32) * 0.1
    bias = jax.random.normal(kb, (C, 1), dtype=jnp.float32) * 0.01

    # deterministic sinusoidal time embedding per channel, folded into the bias
    t = 10
    c_idx = jnp.arange(C, dtype=jnp.float32)
    temb = jnp.sin(float(t) / (10000.0 ** (c_idx / C))).reshape(C, 1).astype(jnp.float32)
    b_plus_temb = (bias + temb).astype(jnp.float32)

    # DDPM scheduler coefficients (variance_type='fixed_small'), pre-combined in glue code
    num_train_timesteps = 1000
    betas = jnp.linspace(1e-4, 0.02, num_train_timesteps, dtype=jnp.float32)
    alphas_cumprod = jnp.cumprod(1.0 - betas)
    alpha_prod_t = alphas_cumprod[t]
    alpha_prod_t_prev = alphas_cumprod[t - 1] if t > 0 else jnp.float32(1.0)
    beta_prod_t = 1.0 - alpha_prod_t
    beta_prod_t_prev = 1.0 - alpha_prod_t_prev
    current_alpha_t = alpha_prod_t / alpha_prod_t_prev
    current_beta_t = 1.0 - current_alpha_t
    coef1 = jnp.sqrt(alpha_prod_t_prev) * current_beta_t / beta_prod_t
    coef2 = jnp.sqrt(current_alpha_t) * beta_prod_t_prev / beta_prod_t
    variance = jnp.maximum(beta_prod_t_prev / beta_prod_t * current_beta_t, 1e-20)
    std = jnp.sqrt(variance) if t > 0 else jnp.float32(0.0)
    inv_sqrt_abar = 1.0 / jnp.sqrt(alpha_prod_t)
    cb = jnp.sqrt(beta_prod_t) * inv_sqrt_abar      # sqrt(1 - abar_t) / sqrt(abar_t)

    prev, mean = hgf_node_forward(x, noise, w, b_plus_temb,
                                  inv_sqrt_abar, cb, coef1, coef2, std)
    jax.block_until_ready(prev)
    jax.block_until_ready(mean)

    # pure-JAX reference check (same math as HGFNode.forward with the synthetic policy)
    x3 = x.reshape(B, C, H * W)
    n3 = noise.reshape(B, C, H * W)
    eps_ref = jnp.einsum("oc,bcp->bop", w, x3) + b_plus_temb[None]
    pred_x0_ref = jnp.clip(inv_sqrt_abar * x3 - cb * eps_ref, -1.0, 1.0)
    mean_expected = coef1 * pred_x0_ref + coef2 * x3
    prev_expected = mean_expected + std * n3
    assert jnp.allclose(mean, mean_expected.reshape(B, C, H, W), atol=1e-5, rtol=1e-5)
    assert jnp.allclose(prev, prev_expected.reshape(B, C, H, W), atol=1e-5, rtol=1e-5)

    print("KERNEL_OK")
</pallas_src>

<mosaic_0001>
module attributes {stable_mosaic.version = 11 : i64} {
  func.func @hgf_step_kernel(%arg0: i32, %arg1: i32, %arg2: memref<3xf32, #tpu.memory_space<smem>>, %arg3: memref<8x8xf32, #tpu.memory_space<vmem>>, %arg4: memref<8x1xf32, #tpu.memory_space<vmem>>, %arg5: memref<8x256xf32, #tpu.memory_space<vmem>>, %arg6: memref<8x256xf32, #tpu.memory_space<vmem>>, %arg7: memref<8x256xf32, #tpu.memory_space<vmem>>, %arg8: memref<8x256xf32, #tpu.memory_space<vmem>>) attributes {dimension_semantics = [#tpu.dimension_semantics<parallel>, #tpu.dimension_semantics<parallel>], iteration_bounds = array<i64: 1, 1>, scalar_prefetch = 0 : i64, scratch_operands = 0 : i64, tpu.core_type = #tpu.core_type<tc>, window_params = [{transform_indices = @transform_0, window_bounds = array<i64: 3>}, {pipeline_mode = #tpu.pipeline_mode<synchronous>, transform_indices = @transform_1, window_bounds = array<i64: 8, 8>}, {pipeline_mode = #tpu.pipeline_mode<synchronous>, transform_indices = @transform_2, window_bounds = array<i64: 8, 1>}, {transform_indices = @transform_3, window_bounds = array<i64: 8, 256>}, {transform_indices = @transform_4, window_bounds = array<i64: 8, 256>}, {transform_indices = @transform_5, window_bounds = array<i64: 8, 256>}, {transform_indices = @transform_6, window_bounds = array<i64: 8, 256>}]} {
    %c0 = arith.constant 0 : index
    %0 = memref.load %arg2[%c0] : memref<3xf32, #tpu.memory_space<smem>>
    %c1 = arith.constant 1 : index
    %1 = memref.load %arg2[%c1] : memref<3xf32, #tpu.memory_space<smem>>
    %c2 = arith.constant 2 : index
    %2 = memref.load %arg2[%c2] : memref<3xf32, #tpu.memory_space<smem>>
    %c0_0 = arith.constant 0 : index
    %c0_1 = arith.constant 0 : index
    %3 = vector.load %arg5[%c0_0, %c0_1] : memref<8x256xf32, #tpu.memory_space<vmem>>, vector<8x256xf32>
    %c0_2 = arith.constant 0 : index
    %c0_3 = arith.constant 0 : index
    %4 = vector.load %arg3[%c0_2, %c0_3] : memref<8x8xf32, #tpu.memory_space<vmem>>, vector<8x8xf32>
    %c0_4 = arith.constant 0 : index
    %c0_5 = arith.constant 0 : index
    %5 = vector.load %arg4[%c0_4, %c0_5] : memref<8x1xf32, #tpu.memory_space<vmem>>, vector<8x1xf32>
    %6 = vector.extract_strided_slice %4 {offsets = [0, 0], sizes = [8, 1], strides = [1, 1]} : vector<8x8xf32> to vector<8x1xf32>
    %7 = vector.extract_strided_slice %3 {offsets = [0, 0], sizes = [1, 256], strides = [1, 1]} : vector<8x256xf32> to vector<1x256xf32>
    %8 = vector.broadcast %6 : vector<8x1xf32> to vector<8x256xf32>
    %9 = vector.broadcast %7 : vector<1x256xf32> to vector<8x256xf32>
    %10 = arith.mulf %8, %9 : vector<8x256xf32>
    %11 = vector.broadcast %5 : vector<8x1xf32> to vector<8x256xf32>
    %12 = arith.addf %11, %10 : vector<8x256xf32>
    %13 = vector.extract_strided_slice %4 {offsets = [0, 1], sizes = [8, 1], strides = [1, 1]} : vector<8x8xf32> to vector<8x1xf32>
    %14 = vector.extract_strided_slice %3 {offsets = [1, 0], sizes = [1, 256], strides = [1, 1]} : vector<8x256xf32> to vector<1x256xf32>
    %15 = vector.broadcast %13 : vector<8x1xf32> to vector<8x256xf32>
    %16 = vector.broadcast %14 : vector<1x256xf32> to vector<8x256xf32>
    %17 = arith.mulf %15, %16 : vector<8x256xf32>
    %18 = arith.addf %12, %17 : vector<8x256xf32>
    %19 = vector.extract_strided_slice %4 {offsets = [0, 2], sizes = [8, 1], strides = [1, 1]} : vector<8x8xf32> to vector<8x1xf32>
    %20 = vector.extract_strided_slice %3 {offsets = [2, 0], sizes = [1, 256], strides = [1, 1]} : vector<8x256xf32> to vector<1x256xf32>
    %21 = vector.broadcast %19 : vector<8x1xf32> to vector<8x256xf32>
    %22 = vector.broadcast %20 : vector<1x256xf32> to vector<8x256xf32>
    %23 = arith.mulf %21, %22 : vector<8x256xf32>
    %24 = arith.addf %18, %23 : vector<8x256xf32>
    %25 = vector.extract_strided_slice %4 {offsets = [0, 3], sizes = [8, 1], strides = [1, 1]} : vector<8x8xf32> to vector<8x1xf32>
    %26 = vector.extract_strided_slice %3 {offsets = [3, 0], sizes = [1, 256], strides = [1, 1]} : vector<8x256xf32> to vector<1x256xf32>
    %27 = vector.broadcast %25 : vector<8x1xf32> to vector<8x256xf32>
    %28 = vector.broadcast %26 : vector<1x256xf32> to vector<8x256xf32>
    %29 = arith.mulf %27, %28 : vector<8x256xf32>
    %30 = arith.addf %24, %29 : vector<8x256xf32>
    %31 = vector.extract_strided_slice %4 {offsets = [0, 4], sizes = [8, 1], strides = [1, 1]} : vector<8x8xf32> to vector<8x1xf32>
    %32 = vector.extract_strided_slice %3 {offsets = [4, 0], sizes = [1, 256], strides = [1, 1]} : vector<8x256xf32> to vector<1x256xf32>
    %33 = vector.broadcast %31 : vector<8x1xf32> to vector<8x256xf32>
    %34 = vector.broadcast %32 : vector<1x256xf32> to vector<8x256xf32>
    %35 = arith.mulf %33, %34 : vector<8x256xf32>
    %36 = arith.addf %30, %35 : vector<8x256xf32>
    %37 = vector.extract_strided_slice %4 {offsets = [0, 5], sizes = [8, 1], strides = [1, 1]} : vector<8x8xf32> to vector<8x1xf32>
    %38 = vector.extract_strided_slice %3 {offsets = [5, 0], sizes = [1, 256], strides = [1, 1]} : vector<8x256xf32> to vector<1x256xf32>
    %39 = vector.broadcast %37 : vector<8x1xf32> to vector<8x256xf32>
    %40 = vector.broadcast %38 : vector<1x256xf32> to vector<8x256xf32>
    %41 = arith.mulf %39, %40 : vector<8x256xf32>
    %42 = arith.addf %36, %41 : vector<8x256xf32>
    %43 = vector.extract_strided_slice %4 {offsets = [0, 6], sizes = [8, 1], strides = [1, 1]} : vector<8x8xf32> to vector<8x1xf32>
    %44 = vector.extract_strided_slice %3 {offsets = [6, 0], sizes = [1, 256], strides = [1, 1]} : vector<8x256xf32> to vector<1x256xf32>
    %45 = vector.broadcast %43 : vector<8x1xf32> to vector<8x256xf32>
    %46 = vector.broadcast %44 : vector<1x256xf32> to vector<8x256xf32>
    %47 = arith.mulf %45, %46 : vector<8x256xf32>
    %48 = arith.addf %42, %47 : vector<8x256xf32>
    %49 = vector.extract_strided_slice %4 {offsets = [0, 7], sizes = [8, 1], strides = [1, 1]} : vector<8x8xf32> to vector<8x1xf32>
    %50 = vector.extract_strided_slice %3 {offsets = [7, 0], sizes = [1, 256], strides = [1, 1]} : vector<8x256xf32> to vector<1x256xf32>
    %51 = vector.broadcast %49 : vector<8x1xf32> to vector<8x256xf32>
    %52 = vector.broadcast %50 : vector<1x256xf32> to vector<8x256xf32>
    %53 = arith.mulf %51, %52 : vector<8x256xf32>
    %54 = arith.addf %48, %53 : vector<8x256xf32>
    %cst = arith.constant -1.000000e+00 : f32
    %cst_6 = arith.constant 1.000000e+00 : f32
    %55 = vector.broadcast %cst : f32 to vector<8x256xf32>
    %56 = arith.maximumf %55, %54 : vector<8x256xf32>
    %57 = vector.broadcast %cst_6 : f32 to vector<8x256xf32>
    %58 = arith.minimumf %57, %56 : vector<8x256xf32>
    %59 = vector.broadcast %0 : f32 to vector<8x256xf32>
    %60 = arith.mulf %59, %58 : vector<8x256xf32>
    %61 = vector.broadcast %1 : f32 to vector<8x256xf32>
    %62 = arith.mulf %61, %3 : vector<8x256xf32>
    %63 = arith.addf %60, %62 : vector<8x256xf32>
    %c0_7 = arith.constant 0 : index
    %c0_8 = arith.constant 0 : index
    %64 = vector.load %arg8[%c0_7, %c0_8] : memref<8x256xf32, #tpu.memory_space<vmem>>, vector<8x256xf32>
    tpu.vector_store %arg8[%c0_7, %c0_8], %63 {strides = array<i32>} : memref<8x256xf32, #tpu.memory_space<vmem>>, vector<8x256xf32>,
    %c0_9 = arith.constant 0 : index
    %c0_10 = arith.constant 0 : index
    %65 = vector.load %arg6[%c0_9, %c0_10] : memref<8x256xf32, #tpu.memory_space<vmem>>, vector<8x256xf32>
    %66 = vector.broadcast %2 : f32 to vector<8x256xf32>
    %67 = arith.mulf %66, %65 : vector<8x256xf32>
    %68 = arith.addf %63, %67 : vector<8x256xf32>
    %c0_11 = arith.constant 0 : index
    %c0_12 = arith.constant 0 : index
    %69 = vector.load %arg7[%c0_11, %c0_12] : memref<8x256xf32, #tpu.memory_space<vmem>>, vector<8x256xf32>
    tpu.vector_store %arg7[%c0_11, %c0_12], %68 {strides = array<i32>} : memref<8x256xf32, #tpu.memory_space<vmem>>, vector<8x256xf32>,
    return
  }
  func.func @transform_0(%arg0: i32, %arg1: i32) -> i32 {
    %c0_i32 = arith.constant 0 : i32
    %c0_i32_0 = arith.constant 0 : i32
    return %c0_i32 : i32
  }
  func.func @transform_1(%arg0: i32, %arg1: i32) -> (i32, i32) {
    %c0_i32 = arith.constant 0 : i32
    %c0_i32_0 = arith.constant 0 : i32
    %c0_i32_1 = arith.constant 0 : i32
    return %c0_i32, %c0_i32_0 : i32, i32
  }
  func.func @transform_2(%arg0: i32, %arg1: i32) -> (i32, i32) {
    %c0_i32 = arith.constant 0 : i32
    %c0_i32_0 = arith.constant 0 : i32
    %c0_i32_1 = arith.constant 0 : i32
    return %c0_i32, %c0_i32_0 : i32, i32
  }
  func.func @transform_3(%arg0: i32, %arg1: i32) -> (i32, i32) {
    %c0_i32 = arith.constant 0 : i32
    return %arg0, %arg1 : i32, i32
  }
  func.func @transform_4(%arg0: i32, %arg1: i32) -> (i32, i32) {
    %c0_i32 = arith.constant 0 : i32
    return %arg0, %arg1 : i32, i32
  }
  func.func @transform_5(%arg0: i32, %arg1: i32) -> (i32, i32) {
    %c0_i32 = arith.constant 0 : i32
    return %arg0, %arg1 : i32, i32
  }
  func.func @transform_6(%arg0: i32, %arg1: i32) -> (i32, i32) {
    %c0_i32 = arith.constant 0 : i32
    return %arg0, %arg1 : i32, i32
  }
}

</mosaic_0001>

<llo_original>
// kernel: tpu_custom_call.1
$region0: #{tpu_custom_call.1}
  #allocation0 [shape = 'u32[]', space=smem, size = 0x4, offset = 0x4, fixed_abs, tag = 'smem constant byte address 0x4 - core index']
  #allocation1 [shape = 'u32[144,128]{1,0:T(1,128)}', space=vmem, size = 0x12000, scoped, tag = 'internal scratch']
  %s0 = inlined_call_operand.hbm [shape: f32[3], index: 0, kind: input, shape index: {}]
  %s1 = inlined_call_operand.hbm [shape: f32[8,8], index: 1, kind: input, shape index: {}]
  %s2 = inlined_call_operand.vmem [shape: f32[8,1], index: 2, kind: input, shape index: {}]
  %s3 = inlined_call_operand.hbm [shape: f32[8,256], index: 3, kind: input, shape index: {}]
  %s4 = inlined_call_operand.vmem [shape: f32[8,256], index: 4, kind: input, shape index: {}]
  %s5 = inlined_call_operand.hbm [shape: f32[8,256], index: 5, kind: output, shape index: {0}]
  %s6 = inlined_call_operand.hbm [shape: f32[8,256], index: 6, kind: output, shape index: {1}]
  %7 = xla_tuple %s5, %s6
  %s8 = sld [smem:[#allocation0]]
  $region50: #{tpu_custom_call.1} parent=0
    _
  %s10 = ssub.s32 1, %s8
  %s11 = scalar_select 0, %s10, %s8
  $region1: #{tpu_custom_call.1} parent=0
    #allocation2 [shape = 'u8[512]{0}', space=smem, size = 0x200, scoped, tag = 'input window, operand 0, single buffered']
    #allocation3 [shape = 's32[1]{0}', space=sflag, size = 0x4, scoped, tag = 'scoped memory for tpu_custom_call.1']
    #allocation4 [shape = 's32[1]{0}', space=sflag, size = 0x4, scoped, tag = 'scoped memory for tpu_custom_call.1']
    #allocation5 [shape = 's32[1]{0}', space=sflag, size = 0x4, scoped, tag = 'scoped memory for tpu_custom_call.1']
    #allocation6 [shape = 'u8[4096]{0}', space=vmem, size = 0x1000, scoped, tag = 'input window, operand 1, single buffered']
    #allocation7 [shape = 'u8[8192]{0}', space=vmem, size = 0x2000, scoped, tag = 'input window, operand 3, single buffered']
    #allocation8 [shape = 's32[1]{0}', space=sflag, size = 0x4, scoped, tag = 'scoped memory for tpu_custom_call.1']
    #allocation9 [shape = 'u8[8192]{0}', space=vmem, size = 0x2000, scoped, tag = 'output window, operand 0, single buffered']
    #allocation10 [shape = 'u8[8192]{0}', space=vmem, size = 0x2000, scoped, tag = 'output window, operand 1, single buffered']
    #allocation11 [shape = 's32[1]{0}', space=sflag, size = 0x4, scoped, tag = 'scoped memory for tpu_custom_call.1']
    %12 = vsyncpa [#allocation5], 0
    %13 = vsyncpa [#allocation3], 0
    %14 = vsyncpa [#allocation8], 0
    %15 = vsyncpa [#allocation4], 0
    %16 = vsyncpa [#allocation11], 0
    // Predicated region
    $region2: #{tpu_custom_call.1} parent=1 // pred_check
      _
    $region3: #{tpu_custom_call.1} parent=1 // pred_check_branch
      %18 = sbr.rel (0) target = $region5
    $region4: #{tpu_custom_call.1} parent=1 // pred_region
      %s20 = ssub.s32 16, 16
      %21 = vsyncadd [#allocation5], %s20
      %24 = dma.hbm_to_smem %s0, 16, [#allocation2], [#allocation5]
    $region5: #{tpu_custom_call.1} parent=1 // pred_fallthru
      _
    // Predicated region
    $region6: #{tpu_custom_call.1} parent=1 // pred_check
      _
    $region7: #{tpu_custom_call.1} parent=1 // pred_check_branch
      %26 = sbr.rel (0) target = $region9
    $region8: #{tpu_custom_call.1} parent=1 // pred_region
      %s28 = ssub.s32 128, 128
      %29 = vsyncadd [#allocation3], %s28
      %s31 = sshll.u32 [#allocation6], 4
      %s32 = int_to_ptr.vmem [resolvable:$true] %s31
      %34 = dma.hbm_to_vmem [thread:$0]  %s1, 128, %s32, [#allocation3]
    $region9: #{tpu_custom_call.1} parent=1 // pred_fallthru
      _
    // Predicated region
    $region10: #{tpu_custom_call.1} parent=1 // pred_check
      _
    $region11: #{tpu_custom_call.1} parent=1 // pred_check_branch
      %36 = sbr.rel (0) target = $region13
    $region12: #{tpu_custom_call.1} parent=1 // pred_region
      _
    $region13: #{tpu_custom_call.1} parent=1 // pred_fallthru
      _
    // Predicated region
    $region14: #{tpu_custom_call.1} parent=1 // pred_check
      _
    $region15: #{tpu_custom_call.1} parent=1 // pred_check_branch
      %38 = sbr.rel (0) target = $region17
    $region16: #{tpu_custom_call.1} parent=1 // pred_region
      %s40 = ssub.s32 256, 256
      %41 = vsyncadd [#allocation8], %s40
      %s43 = sshll.u32 [#allocation7], 4
      %s44 = int_to_ptr.vmem [resolvable:$true] %s43
      %46 = dma.hbm_to_vmem [thread:$0]  %s3, 256, %s44, [#allocation8]
    $region17: #{tpu_custom_call.1} parent=1 // pred_fallthru
      _
    // Predicated region
    $region18: #{tpu_custom_call.1} parent=1 // pred_check
      _
    $region19: #{tpu_custom_call.1} parent=1 // pred_check_branch
      %48 = sbr.rel (0) target = $region21
    $region20: #{tpu_custom_call.1} parent=1 // pred_region
      _
    $region21: #{tpu_custom_call.1} parent=1 // pred_fallthru
      _
    // Predicated region
    $region22: #{tpu_custom_call.1} parent=1 // pred_check
      _
    $region23: #{tpu_custom_call.1} parent=1 // pred_check_branch
      %50 = sbr.rel (0) target = $region25
    $region24: #{tpu_custom_call.1} parent=1 // pred_region
      %51 = dma.done [#allocation5], 16
    $region25: #{tpu_custom_call.1} parent=1 // pred_fallthru
      _
    // Predicated region
    $region26: #{tpu_custom_call.1} parent=1 // pred_check
      _
    $region27: #{tpu_custom_call.1} parent=1 // pred_check_branch
      %53 = sbr.rel (0) target = $region29
    $region28: #{tpu_custom_call.1} parent=1 // pred_region
      %54 = dma.done [#allocation3], 128
    $region29: #{tpu_custom_call.1} parent=1 // pred_fallthru
      _
    // Predicated region
    $region30: #{tpu_custom_call.1} parent=1 // pred_check
      _
    $region31: #{tpu_custom_call.1} parent=1 // pred_check_branch
      %56 = sbr.rel (0) target = $region33
    $region32: #{tpu_custom_call.1} parent=1 // pred_region
      %57 = dma.done [#allocation8], 256
    $region33: #{tpu_custom_call.1} parent=1 // pred_fallthru
      _
    %58 = sfence
    %s59 = sld [smem:[#allocation2]]
    %s60 = sld [smem:[#allocation2 + $0x1]]
    %s61 = sld [smem:[#allocation2 + $0x2]]
    %v62 = vld [vmem:[#allocation7] sm:$0xff]
    %v63 = vld [vmem:[#allocation7 + $0x8] sm:$0xff]
    %v64 = vld [vmem:[#allocation6] sm:$0xff]
    %v65 = vld [vmem:[%s2] sm:$0xff]
    %67 = vset.pattern.permute.xlu0 0
    %68 = vperm.xlu0 %67, %v64
    %v69 = vpop.permute.xlu0 %68
    %v71 = vlaneseq
    %v72 = vshrl.u32 %v71, 7
    %v73 = vsub.s32 0, %v72
    %v74 = vrot.slane %v62, %v73
    %v75 = vlaneseq
    %v76 = vshrl.u32 %v75, 7
    %v77 = vsub.s32 0, %v76
    %v78 = vrot.slane %v63, %v77
    %v79 = vmul.f32 %v69, %v74
    %v80 = vmul.f32 %v69, %v78
    %82 = vset.pattern.permute.xlu0 0
    %83 = vperm.xlu0 %82, %v65
    %v84 = vpop.permute.xlu0 %83
    %v86 = vadd.f32 %v84, %v79
    %v87 = vadd.f32 %v84, %v80
    %88 = vset.pattern.permute.xlu0 1
    %89 = vperm.xlu0 %88, %v64
    %v90 = vpop.permute.xlu0 %89
    %v92 = vlaneseq
    %v93 = vshrl.u32 %v92, 7
    %v94 = vsub.s32 1, %v93
    %v95 = vrot.slane %v62, %v94
    %v96 = vlaneseq
    %v97 = vshrl.u32 %v96, 7
    %v98 = vsub.s32 1, %v97
    %v99 = vrot.slane %v63, %v98
    %v100 = vmul.f32 %v90, %v95
    %v101 = vmul.f32 %v90, %v99
    %v102 = vadd.f32 %v86, %v100
    %v103 = vadd.f32 %v87, %v101
    %104 = vset.pattern.permute.xlu0 2
    %105 = vperm.xlu0 %104, %v64
    %v106 = vpop.permute.xlu0 %105
    %v108 = vlaneseq
    %v109 = vshrl.u32 %v108, 7
    %v110 = vsub.s32 2, %v109
    %v111 = vrot.slane %v62, %v110
    %v112 = vlaneseq
    %v113 = vshrl.u32 %v112, 7
    %v114 = vsub.s32 2, %v113
    %v115 = vrot.slane %v63, %v114
    %v116 = vmul.f32 %v106, %v111
    %v117 = vmul.f32 %v106, %v115
    %v118 = vadd.f32 %v102, %v116
    %v119 = vadd.f32 %v103, %v117
    %120 = vset.pattern.permute.xlu0 3
    %121 = vperm.xlu0 %120, %v64
    %v122 = vpop.permute.xlu0 %121
    %v124 = vlaneseq
    %v125 = vshrl.u32 %v124, 7
    %v126 = vsub.s32 3, %v125
    %v127 = vrot.slane %v62, %v126
    %v128 = vlaneseq
    %v129 = vshrl.u32 %v128, 7
    %v130 = vsub.s32 3, %v129
    %v131 = vrot.slane %v63, %v130
    %v132 = vmul.f32 %v122, %v127
    %v133 = vmul.f32 %v122, %v131
    %v134 = vadd.f32 %v118, %v132
    %v135 = vadd.f32 %v119, %v133
    %136 = vset.pattern.permute.xlu0 4
    %137 = vperm.xlu0 %136, %v64
    %v138 = vpop.permute.xlu0 %137
    %v140 = vlaneseq
    %v141 = vshrl.u32 %v140, 7
    %v142 = vsub.s32 4, %v141
    %v143 = vrot.slane %v62, %v142
    %v144 = vlaneseq
    %v145 = vshrl.u32 %v144, 7
    %v146 = vsub.s32 4, %v145
    %v147 = vrot.slane %v63, %v146
    %v148 = vmul.f32 %v138, %v143
    %v149 = vmul.f32 %v138, %v147
    %v150 = vadd.f32 %v134, %v148
    %v151 = vadd.f32 %v135, %v149
    %152 = vset.pattern.permute.xlu0 5
    %153 = vperm.xlu0 %152, %v64
    %v154 = vpop.permute.xlu0 %153
    %v156 = vlaneseq
    %v157 = vshrl.u32 %v156, 7
    %v158 = vsub.s32 5, %v157
    %v159 = vrot.slane %v62, %v158
    %v160 = vlaneseq
    %v161 = vshrl.u32 %v160, 7
    %v162 = vsub.s32 5, %v161
    %v163 = vrot.slane %v63, %v162
    %v164 = vmul.f32 %v154, %v159
    %v165 = vmul.f32 %v154, %v163
    %v166 = vadd.f32 %v150, %v164
    %v167 = vadd.f32 %v151, %v165
    %168 = vset.pattern.permute.xlu0 6
    %169 = vperm.xlu0 %168, %v64
    %v170 = vpop.permute.xlu0 %169
    %v172 = vlaneseq
    %v173 = vshrl.u32 %v172, 7
    %v174 = vsub.s32 6, %v173
    %v175 = vrot.slane %v62, %v174
    %v176 = vlaneseq
    %v177 = vshrl.u32 %v176, 7
    %v178 = vsub.s32 6, %v177
    %v179 = vrot.slane %v63, %v178
    %v180 = vmul.f32 %v170, %v175
    %v181 = vmul.f32 %v170, %v179
    %v182 = vadd.f32 %v166, %v180
    %v183 = vadd.f32 %v167, %v181
    %184 = vset.pattern.permute.xlu0 7
    %185 = vperm.xlu0 %184, %v64
    %v186 = vpop.permute.xlu0 %185
    %v188 = vlaneseq
    %v189 = vshrl.u32 %v188, 7
    %v190 = vsub.s32 7, %v189
    %v191 = vrot.slane %v62, %v190
    %v192 = vlaneseq
    %v193 = vshrl.u32 %v192, 7
    %v194 = vsub.s32 7, %v193
    %v195 = vrot.slane %v63, %v194
    %v196 = vmul.f32 %v186, %v191
    %v197 = vmul.f32 %v186, %v195
    %v198 = vadd.f32 %v182, %v196
    %v199 = vadd.f32 %v183, %v197
    %v200 = vmax.f32 %v198, -1.0
    %v201 = vmax.f32 %v199, -1.0
    %v202 = vmin.f32 %v200, 1.0
    %v203 = vmin.f32 %v201, 1.0
    %v204 = vstv %s59
    %v205 = vmul.f32 %v204, %v202
    %v206 = vmul.f32 %v204, %v203
    %v207 = vstv %s60
    %v208 = vmul.f32 %v207, %v62
    %v209 = vmul.f32 %v207, %v63
    %v210 = vadd.f32 %v205, %v208
    %v211 = vadd.f32 %v206, %v209
    %212 = vst [vmem:[#allocation10] sm:$0xff] %v210
    %213 = vst [vmem:[#allocation10 + $0x8] sm:$0xff] %v211
    %v214 = vld [vmem:[%s4] sm:$0xff]
    %v215 = vld [vmem:[%s4 + $0x8] sm:$0xff]
    %v216 = vstv %s61
    %v217 = vmul.f32 %v216, %v214
    %v218 = vmul.f32 %v216, %v215
    %v219 = vadd.f32 %v210, %v217
    %v220 = vadd.f32 %v211, %v218
    %221 = vst [vmem:[#allocation9] sm:$0xff] %v219
    %222 = vst [vmem:[#allocation9 + $0x8] sm:$0xff] %v220
    // Predicated region
    $region34: #{tpu_custom_call.1} parent=1 // pred_check
      _
    $region35: #{tpu_custom_call.1} parent=1 // pred_check_branch
      %224 = sbr.rel (0) target = $region37
    $region36: #{tpu_custom_call.1} parent=1 // pred_region
      %s226 = ssub.s32 256, 256
      %227 = vsyncadd [#allocation4], %s226
      %s229 = sshll.u32 [#allocation9], 4
      %s230 = int_to_ptr.vmem [resolvable:$true] %s229
      %232 = dma.vmem_to_hbm [thread:$0]  %s230, 256, %s5, [#allocation4]
    $region37: #{tpu_custom_call.1} parent=1 // pred_fallthru
      _
    // Predicated region
    $region38: #{tpu_custom_call.1} parent=1 // pred_check
      _
    $region39: #{tpu_custom_call.1} parent=1 // pred_check_branch
      %234 = sbr.rel (0) target = $region41
    $region40: #{tpu_custom_call.1} parent=1 // pred_region
      %s236 = ssub.s32 256, 256
      %237 = vsyncadd [#allocation11], %s236
      %s239 = sshll.u32 [#allocation10], 4
      %s240 = int_to_ptr.vmem [resolvable:$true] %s239
      %242 = dma.vmem_to_hbm [thread:$0]  %s240, 256, %s6, [#allocation11]
    $region41: #{tpu_custom_call.1} parent=1 // pred_fallthru
      _
    // Predicated region
    $region42: #{tpu_custom_call.1} parent=1 // pred_check
      _
    $region43: #{tpu_custom_call.1} parent=1 // pred_check_branch
      %244 = sbr.rel (0) target = $region45
    $region44: #{tpu_custom_call.1} parent=1 // pred_region
      %245 = dma.done [#allocation4], 256
    $region45: #{tpu_custom_call.1} parent=1 // pred_fallthru
      _
    // Predicated region
    $region46: #{tpu_custom_call.1} parent=1 // pred_check
      _
    $region47: #{tpu_custom_call.1} parent=1 // pred_check_branch
      %247 = sbr.rel (0) target = $region49
    $region48: #{tpu_custom_call.1} parent=1 // pred_region
      %248 = dma.done [#allocation11], 256
    $region49: #{tpu_custom_call.1} parent=1 // pred_fallthru
      _
    %249 = vsyncpa [#allocation3], 1
    %250 = vsyncpa [#allocation8], 1
    %251 = vsyncpa [#allocation4], 1
    %252 = vsyncpa [#allocation11], 1
    %253 = vsyncpa [#allocation5], 1

</llo_original>
